<compile_context>
chip_gen: v5e
topology: v5e:2x2
jax: 0.10.0
libtpu: 0.0.40
codegen_flags: <defaults>
</compile_context>

<pallas_src>
import functools
from math import sqrt

import jax
import jax.numpy as jnp
from jax.experimental import pallas as pl
from jax.experimental.pallas import tpu as pltpu


@functools.lru_cache(maxsize=1)
def _vmem_limit():
    """Generation-aware scoped-VMEM budget (bytes)."""
    cap = 64 * 1024 * 1024
    try:
        info = pltpu.get_tpu_info()
        cap = int(getattr(info, "vmem_capacity_bytes", cap))
    except Exception:
        pass
    # ~5/8 of physical: ~40 MiB on v7x (64 MiB/TC), ~80 MiB on v5e/v6e.
    return int(max(32 * 1024 * 1024, min(cap * 5 // 8, 100 * 1024 * 1024)))


def _pick_tile(dim, pref, align):
    """Largest tile <= pref that divides dim: full dim if dim <= pref, else the
    largest multiple of `align` dividing dim, else the largest plain divisor."""
    if dim <= pref:
        return dim
    t = (pref // align) * align
    while t >= align:
        if dim % t == 0:
            return t
        t -= align
    for t in range(min(pref, dim), 0, -1):
        if dim % t == 0:
            return t
    return dim


# ---------------------------------------------------------------------------
# Kernel 1: tiled linear  y = x @ W + b
# ---------------------------------------------------------------------------
def _linear_kernel_acc(x_ref, w_ref, b_ref, o_ref, acc_ref):
    """General path: reduction over the K grid axis with f32 VMEM accumulator."""
    @pl.when(pl.program_id(2) == 0)
    def _():
        acc_ref[...] = jnp.zeros_like(acc_ref)

    acc_ref[...] += jnp.dot(x_ref[...], w_ref[...],
                            preferred_element_type=jnp.float32)

    @pl.when(pl.program_id(2) == pl.num_programs(2) - 1)
    def _():
        o_ref[...] = (acc_ref[...] + b_ref[...].astype(jnp.float32)
                      ).astype(o_ref.dtype)


def _linear_kernel_single_k(x_ref, w_ref, b_ref, o_ref):
    """K fits in one pass: no reduction axis, no accumulator scratch."""
    acc = jnp.dot(x_ref[...], w_ref[...], preferred_element_type=jnp.float32)
    o_ref[...] = (acc + b_ref[...].astype(jnp.float32)).astype(o_ref.dtype)


def linear(x, w, b, *, tm=512, tn=256, tk=1024):
    """x: (M, K), w: (K, N), b: (N,) -> (M, N)."""
    M, K = x.shape
    _, N = w.shape
    tm = _pick_tile(M, tm, 8)      # sublane axis
    tn = _pick_tile(N, tn, 128)    # lane axis
    tk = _pick_tile(K, tk, 128)
    b2 = b.reshape(1, N)
    vmem = _vmem_limit()

    if tk == K:
        # Single MXU-streamed pass over K.
        return pl.pallas_call(
            _linear_kernel_single_k,
            out_shape=jax.ShapeDtypeStruct((M, N), x.dtype),
            grid_spec=pltpu.PrefetchScalarGridSpec(
                num_scalar_prefetch=0,
                grid=(M // tm, N // tn),
                in_specs=[
                    pl.BlockSpec((tm, K), lambda i, j: (i, 0)),
                    pl.BlockSpec((K, tn), lambda i, j: (0, j)),
                    pl.BlockSpec((1, tn), lambda i, j: (0, j)),
                ],
                out_specs=pl.BlockSpec((tm, tn), lambda i, j: (i, j)),
            ),
            compiler_params=pltpu.CompilerParams(
                dimension_semantics=("parallel", "parallel"),
                vmem_limit_bytes=vmem),
        )(x, w, b2)

    return pl.pallas_call(
        _linear_kernel_acc,
        out_shape=jax.ShapeDtypeStruct((M, N), x.dtype),
        grid_spec=pltpu.PrefetchScalarGridSpec(
            num_scalar_prefetch=0,
            grid=(M // tm, N // tn, K // tk),
            in_specs=[
                pl.BlockSpec((tm, tk), lambda i, j, k: (i, k)),
                pl.BlockSpec((tk, tn), lambda i, j, k: (k, j)),
                pl.BlockSpec((1, tn), lambda i, j, k: (0, j)),
            ],
            out_specs=pl.BlockSpec((tm, tn), lambda i, j, k: (i, j)),
            scratch_shapes=[pltpu.VMEM((tm, tn), jnp.float32)],
        ),
        compiler_params=pltpu.CompilerParams(
            dimension_semantics=("parallel", "parallel", "arbitrary"),
            vmem_limit_bytes=vmem),
    )(x, w, b2)


# ---------------------------------------------------------------------------
# Kernel 2: head-major flash attention (online softmax over kv tiles).
#   q: (B*H, L, E)  k: (B*H, S, E)  v: (B*H, S, Dv)  ->  (B*H, L, Dv)
#   grid = (B*H, q_tiles, kv_tiles); kv axis is the reduction ("arbitrary").
#   NOTE: 1/sqrt(d_k) is already folded into the Q projection weights.
# ---------------------------------------------------------------------------
def _flash_attn_kernel(q_ref, k_ref, v_ref, o_ref, m_ref, l_ref, acc_ref):
    kv = pl.program_id(2)

    @pl.when(kv == 0)
    def _():
        m_ref[...] = jnp.full_like(m_ref, -jnp.inf)
        l_ref[...] = jnp.zeros_like(l_ref)
        acc_ref[...] = jnp.zeros_like(acc_ref)

    q = q_ref[...]                      # (Lt, E)  full-width per-head tile
    k = k_ref[...]                      # (St, E)
    v = v_ref[...]                      # (St, Dv)

    # Contract E on the last dim of BOTH operands -> no k.T on the XLU.
    s = jax.lax.dot_general(
        q, k, dimension_numbers=(((1,), (1,)), ((), ())),
        preferred_element_type=jnp.float32)                    # (Lt, St) f32

    m_prev = m_ref[...]
    m_new = jnp.maximum(m_prev, jnp.max(s, axis=-1, keepdims=True))
    alpha = jnp.exp(m_prev - m_new)
    p = jnp.exp(s - m_new)                                     # (Lt, St) f32
    l_ref[...] = alpha * l_ref[...] + jnp.sum(p, axis=-1, keepdims=True)
    acc_ref[...] = alpha * acc_ref[...] + jnp.dot(
        p.astype(v.dtype), v, preferred_element_type=jnp.float32)
    m_ref[...] = m_new

    @pl.when(kv == pl.num_programs(2) - 1)
    def _():
        inv_l = pl.reciprocal(l_ref[...], approx=True)         # EUP slot
        o_ref[...] = (acc_ref[...] * inv_l).astype(o_ref.dtype)


def flash_attention(q, k, v, *, q_tile=512, kv_tile=1024):
    """q: (BH, L, E), k: (BH, S, E), v: (BH, S, Dv) -> (BH, L, Dv)."""
    BH, L, E = q.shape
    S = k.shape[1]
    Dv = v.shape[2]

    lt = _pick_tile(L, q_tile, 8)
    # Prefer full S (single kv step => K/V fetched once per (batch, head) and
    # reused across q tiles); otherwise a 128-lane-aligned divisor.
    st = _pick_tile(S, kv_tile, 128)
    grid = (BH, L // lt, S // st)

    return pl.pallas_call(
        _flash_attn_kernel,
        out_shape=jax.ShapeDtypeStruct((BH, L, Dv), q.dtype),
        grid_spec=pltpu.PrefetchScalarGridSpec(
            num_scalar_prefetch=0,
            grid=grid,
            in_specs=[
                pl.BlockSpec((None, lt, E), lambda b, qi, ki: (b, qi, 0)),
                pl.BlockSpec((None, st, E), lambda b, qi, ki: (b, ki, 0)),
                pl.BlockSpec((None, st, Dv), lambda b, qi, ki: (b, ki, 0)),
            ],
            out_specs=pl.BlockSpec((None, lt, Dv),
                                   lambda b, qi, ki: (b, qi, 0)),
            scratch_shapes=[
                pltpu.VMEM((lt, 1), jnp.float32),    # running row-max
                pltpu.VMEM((lt, 1), jnp.float32),    # running denominator
                pltpu.VMEM((lt, Dv), jnp.float32),   # running numerator
            ],
        ),
        compiler_params=pltpu.CompilerParams(
            dimension_semantics=("parallel", "parallel", "arbitrary"),
            vmem_limit_bytes=_vmem_limit()),
    )(q, k, v)


# ---------------------------------------------------------------------------
# AttentionLayer forward (glue in plain JAX, hot paths in Pallas)
# ---------------------------------------------------------------------------
def init_params(key, d_model, n_heads, d_keys=None, d_values=None,
                dtype=jnp.float32):
    d_keys = d_keys or d_model // n_heads
    d_values = d_values or d_model // n_heads
    keys = jax.random.split(key, 8)

    def lin_init(kw, kb, fan_in, fan_out):
        bound = 1.0 / sqrt(fan_in)
        w = jax.random.uniform(kw, (fan_in, fan_out), dtype, -bound, bound)
        b = jax.random.uniform(kb, (fan_out,), dtype, -bound, bound)
        return w, b

    return {
        "q": lin_init(keys[0], keys[1], d_model, d_keys * n_heads),
        "k": lin_init(keys[2], keys[3], d_model, d_keys * n_heads),
        "v": lin_init(keys[4], keys[5], d_model, d_values * n_heads),
        "o": lin_init(keys[6], keys[7], d_values * n_heads, d_model),
    }


def attention_layer_forward(params, queries, keys, values, attn_mask=None,
                            n_heads=4, mix=False):
    B, L, d_model = queries.shape
    _, S, _ = keys.shape
    H = n_heads

    wq, bq = params["q"]
    wk, bk = params["k"]
    wv, bv = params["v"]
    wo, bo = params["o"]
    dk_h = wq.shape[1]   # H * d_keys
    dv_h = wv.shape[1]   # H * d_values
    d_k = dk_h // H
    d_v = dv_h // H
    scale = 1.0 / sqrt(d_k)

    # TODO(synk): attn_mask / TriangularCausalMask masking path not implemented.

    # Fold the softmax 1/sqrt(d_k) scale into the query projection (free).
    wq_s = wq * scale
    bq_s = bq * scale

    # Fused projections: the activation tensor is read from HBM only once.
    if queries is keys and keys is values:
        w_qkv = jnp.concatenate([wq_s, wk, wv], axis=1)
        b_qkv = jnp.concatenate([bq_s, bk, bv], axis=0)
        qkv = linear(queries.reshape(B * L, d_model), w_qkv, b_qkv)
        q = qkv[:, :dk_h]
        k = qkv[:, dk_h:2 * dk_h]
        v = qkv[:, 2 * dk_h:]
    elif keys is values:
        q = linear(queries.reshape(B * L, d_model), wq_s, bq_s)
        w_kv = jnp.concatenate([wk, wv], axis=1)
        b_kv = jnp.concatenate([bk, bv], axis=0)
        kv = linear(keys.reshape(B * S, d_model), w_kv, b_kv)
        k = kv[:, :dk_h]
        v = kv[:, dk_h:]
    else:
        q = linear(queries.reshape(B * L, d_model), wq_s, bq_s)
        k = linear(keys.reshape(B * S, d_model), wk, bk)
        v = linear(values.reshape(B * S, d_model), wv, bv)

    # Head-major layout (B*H, seq, head_dim): full-width, aligned per-head MXU
    # operands inside the flash kernel; H rides the parallel grid axis.
    q_hm = q.reshape(B, L, H, d_k).transpose(0, 2, 1, 3).reshape(B * H, L, d_k)
    k_hm = k.reshape(B, S, H, d_k).transpose(0, 2, 1, 3).reshape(B * H, S, d_k)
    v_hm = v.reshape(B, S, H, d_v).transpose(0, 2, 1, 3).reshape(B * H, S, d_v)

    out = flash_attention(q_hm, k_hm, v_hm)           # (B*H, L, d_v)
    out = out.reshape(B, H, L, d_v)

    if mix:
        # PyTorch: (B,L,H,Dv).transpose(2,1).contiguous().view(B,L,-1)
        out = out.reshape(B, L, dv_h)
    else:
        out = out.transpose(0, 2, 1, 3).reshape(B, L, dv_h)

    out = linear(out.reshape(B * L, dv_h), wo, bo).reshape(B, L, d_model)
    return out, None   # output_attention=False


# ---------------------------------------------------------------------------
# Pure-JAX reference (for correctness check)
# ---------------------------------------------------------------------------
def _reference_forward(params, queries, keys, values, n_heads, mix=False):
    B, L, _ = queries.shape
    _, S, _ = keys.shape
    H = n_heads
    wq, bq = params["q"]
    wk, bk = params["k"]
    wv, bv = params["v"]
    wo, bo = params["o"]
    q = (queries @ wq + bq).reshape(B, L, H, -1)
    k = (keys @ wk + bk).reshape(B, S, H, -1)
    v = (values @ wv + bv).reshape(B, S, H, -1)
    E = q.shape[-1]
    scores = jnp.einsum("blhe,bshe->bhls", q, k) / sqrt(E)
    A = jax.nn.softmax(scores, axis=-1)
    out = jnp.einsum("bhls,bshd->blhd", A, v)
    if mix:
        out = jnp.transpose(out, (0, 2, 1, 3))
    out = out.reshape(B, L, -1)
    return out @ wo + bo


if __name__ == "__main__":
    key = jax.random.PRNGKey(0)
    B, L, S, d_model, n_heads = 2, 8, 8, 32, 4

    kx, kq, kk, kv_, kp = jax.random.split(key, 5)
    x = jax.random.normal(kx, (B, L, d_model), jnp.float32)
    queries = jax.random.normal(kq, (B, L, d_model), jnp.float32)
    keys_in = jax.random.normal(kk, (B, S, d_model), jnp.float32)
    values = jax.random.normal(kv_, (B, S, d_model), jnp.float32)

    params = init_params(kp, d_model, n_heads)

    # 1) Self-attention (fused [Wq|Wk|Wv] projection path).
    out_s, _ = attention_layer_forward(params, x, x, x, attn_mask=None,
                                       n_heads=n_heads, mix=False)
    out_s = jax.block_until_ready(out_s)
    assert out_s.shape == (B, L, d_model)
    assert bool(jnp.all(jnp.isfinite(out_s)))
    ref_s = _reference_forward(params, x, x, x, n_heads, mix=False)
    assert jnp.allclose(out_s, ref_s, rtol=2e-2, atol=2e-2), (
        "self-attn max abs err", float(jnp.max(jnp.abs(out_s - ref_s))))

    # 2) Cross-attention (separate projections path).
    out_c, _ = attention_layer_forward(params, queries, keys_in, values,
                                       attn_mask=None, n_heads=n_heads,
                                       mix=False)
    out_c = jax.block_until_ready(out_c)
    ref_c = _reference_forward(params, queries, keys_in, values, n_heads,
                               mix=False)
    assert jnp.allclose(out_c, ref_c, rtol=2e-2, atol=2e-2), (
        "cross-attn max abs err", float(jnp.max(jnp.abs(out_c - ref_c))))

    # 3) mix=True path.
    out_m, _ = attention_layer_forward(params, x, x, x, attn_mask=None,
                                       n_heads=n_heads, mix=True)
    out_m = jax.block_until_ready(out_m)
    ref_m = _reference_forward(params, x, x, x, n_heads, mix=True)
    assert jnp.allclose(out_m, ref_m, rtol=2e-2, atol=2e-2), (
        "mix max abs err", float(jnp.max(jnp.abs(out_m - ref_m))))

    print("KERNEL_OK")
</pallas_src>

<mosaic_0001>
module attributes {stable_mosaic.version = 11 : i64} {
  func.func @_linear_kernel_single_k(%arg0: i32, %arg1: i32, %arg2: memref<16x32xf32, #tpu.memory_space<vmem>>, %arg3: memref<32x96xf32, #tpu.memory_space<vmem>>, %arg4: memref<1x96xf32, #tpu.memory_space<vmem>>, %arg5: memref<16x96xf32, #tpu.memory_space<vmem>>) attributes {dimension_semantics = [#tpu.dimension_semantics<parallel>, #tpu.dimension_semantics<parallel>], iteration_bounds = array<i64: 1, 1>, scalar_prefetch = 0 : i64, scratch_operands = 0 : i64, tpu.core_type = #tpu.core_type<tc>, window_params = [{transform_indices = @transform_0, window_bounds = array<i64: 16, 32>}, {transform_indices = @transform_1, window_bounds = array<i64: 32, 96>}, {transform_indices = @transform_2, window_bounds = array<i64: 1, 96>}, {transform_indices = @transform_3, window_bounds = array<i64: 16, 96>}]} {
    %c0 = arith.constant 0 : index
    %c0_0 = arith.constant 0 : index
    %0 = vector.load %arg2[%c0, %c0_0] : memref<16x32xf32, #tpu.memory_space<vmem>>, vector<16x32xf32>
    %c0_1 = arith.constant 0 : index
    %c0_2 = arith.constant 0 : index
    %1 = vector.load %arg3[%c0_1, %c0_2] : memref<32x96xf32, #tpu.memory_space<vmem>>, vector<32x96xf32>
    %cst = arith.constant dense<0.000000e+00> : vector<16x96xf32>
    %2 = tpu.matmul %0, %1, %cst {dimension_numbers = #tpu.dot_dimension_numbers<[1], [0], [0], [1], [0, 0, 1, 1], [], []>} : vector<16x32xf32>, vector<32x96xf32>, vector<16x96xf32> -> vector<16x96xf32>
    %c0_3 = arith.constant 0 : index
    %c0_4 = arith.constant 0 : index
    %3 = vector.load %arg4[%c0_3, %c0_4] : memref<1x96xf32, #tpu.memory_space<vmem>>, vector<1x96xf32>
    %4 = vector.broadcast %3 : vector<1x96xf32> to vector<16x96xf32>
    %5 = arith.addf %2, %4 : vector<16x96xf32>
    %c0_5 = arith.constant 0 : index
    %c0_6 = arith.constant 0 : index
    %6 = vector.load %arg5[%c0_5, %c0_6] : memref<16x96xf32, #tpu.memory_space<vmem>>, vector<16x96xf32>
    tpu.vector_store %arg5[%c0_5, %c0_6], %5 {strides = array<i32>} : memref<16x96xf32, #tpu.memory_space<vmem>>, vector<16x96xf32>,
    return
  }
  func.func @transform_0(%arg0: i32, %arg1: i32) -> (i32, i32) {
    %c0_i32 = arith.constant 0 : i32
    %c0_i32_0 = arith.constant 0 : i32
    return %arg0, %c0_i32 : i32, i32
  }
  func.func @transform_1(%arg0: i32, %arg1: i32) -> (i32, i32) {
    %c0_i32 = arith.constant 0 : i32
    %c0_i32_0 = arith.constant 0 : i32
    return %c0_i32, %arg1 : i32, i32
  }
  func.func @transform_2(%arg0: i32, %arg1: i32) -> (i32, i32) {
    %c0_i32 = arith.constant 0 : i32
    %c0_i32_0 = arith.constant 0 : i32
    return %c0_i32, %arg1 : i32, i32
  }
  func.func @transform_3(%arg0: i32, %arg1: i32) -> (i32, i32) {
    %c0_i32 = arith.constant 0 : i32
    return %arg0, %arg1 : i32, i32
  }
}

</mosaic_0001>

<llo_original>
// kernel: tpu_custom_call.1
$region0: #{tpu_custom_call.1}
  #allocation0 [shape = 'u32[]', space=smem, size = 0x4, offset = 0x4, fixed_abs, tag = 'smem constant byte address 0x4 - core index']
  #allocation1 [shape = 'u32[72,128]{1,0:T(1,128)}', space=vmem, size = 0x9000, scoped, tag = 'internal scratch']
  %s0 = inlined_call_operand.hbm [shape: f32[16,32], index: 0, kind: input, shape index: {}]
  %s1 = inlined_call_operand.hbm [shape: f32[32,96], index: 1, kind: input, shape index: {}]
  %s2 = inlined_call_operand.vmem [shape: f32[1,96], index: 2, kind: input, shape index: {}]
  %s3 = inlined_call_operand.hbm [shape: f32[16,96], index: 3, kind: output, shape index: {}]
  %s4 = sld [smem:[#allocation0]]
  $region30: #{tpu_custom_call.1} parent=0
    _
  %s6 = ssub.s32 1, %s4
  %s7 = scalar_select 0, %s6, %s4
  $region1: #{tpu_custom_call.1} parent=0
    #allocation2 [shape = 'u8[8192]{0}', space=vmem, size = 0x2000, scoped, tag = 'input window, operand 0, single buffered']
    #allocation3 [shape = 's32[1]{0}', space=sflag, size = 0x4, scoped, tag = 'scoped memory for tpu_custom_call.1']
    #allocation4 [shape = 's32[1]{0}', space=sflag, size = 0x4, scoped, tag = 'scoped memory for tpu_custom_call.1']
    #allocation5 [shape = 'u8[16384]{0}', space=vmem, size = 0x4000, scoped, tag = 'input window, operand 1, single buffered']
    #allocation6 [shape = 's32[1]{0}', space=sflag, size = 0x4, scoped, tag = 'scoped memory for tpu_custom_call.1']
    #allocation7 [shape = 'u8[8192]{0}', space=vmem, size = 0x2000, scoped, tag = 'output window, operand 0, single buffered']
    %8 = vsyncpa [#allocation3], 0
    %9 = vsyncpa [#allocation6], 0
    %10 = vsyncpa [#allocation4], 0
    // Predicated region
    $region2: #{tpu_custom_call.1} parent=1 // pred_check
      _
    $region3: #{tpu_custom_call.1} parent=1 // pred_check_branch
      %12 = sbr.rel (0) target = $region5
    $region4: #{tpu_custom_call.1} parent=1 // pred_region
      %14 = vsyncadd [#allocation3], 0
      %s15 = sshll.u32 %s0, 4
      %s16 = int_to_ptr.hbm [resolvable:$true] %s15
      %s17 = sshll.u32 [#allocation2], 4
      %s18 = int_to_ptr.vmem [resolvable:$true] %s17
      %23 = dma.hbm_to_vmem [thread:$0]  %s16, 256, %s18, [#allocation3], 128, 128, 8
    $region5: #{tpu_custom_call.1} parent=1 // pred_fallthru
      _
    // Predicated region
    $region6: #{tpu_custom_call.1} parent=1 // pred_check
      _
    $region7: #{tpu_custom_call.1} parent=1 // pred_check_branch
      %25 = sbr.rel (0) target = $region9
    $region8: #{tpu_custom_call.1} parent=1 // pred_region
      %27 = vsyncadd [#allocation6], 0
      %s28 = sshll.u32 %s1, 4
      %s29 = int_to_ptr.hbm [resolvable:$true] %s28
      %s30 = sshll.u32 [#allocation5], 4
      %s31 = int_to_ptr.vmem [resolvable:$true] %s30
      %36 = dma.hbm_to_vmem [thread:$0]  %s29, 512, %s31, [#allocation6], 128, 128, 8
    $region9: #{tpu_custom_call.1} parent=1 // pred_fallthru
      _
    // Predicated region
    $region10: #{tpu_custom_call.1} parent=1 // pred_check
      _
    $region11: #{tpu_custom_call.1} parent=1 // pred_check_branch
      %38 = sbr.rel (0) target = $region13
    $region12: #{tpu_custom_call.1} parent=1 // pred_region
      _
    $region13: #{tpu_custom_call.1} parent=1 // pred_fallthru
      _
    // Predicated region
    $region14: #{tpu_custom_call.1} parent=1 // pred_check
      _
    $region15: #{tpu_custom_call.1} parent=1 // pred_check_branch
      %40 = sbr.rel (0) target = $region17
    $region16: #{tpu_custom_call.1} parent=1 // pred_region
      %42 = dma.done [#allocation3], 256
    $region17: #{tpu_custom_call.1} parent=1 // pred_fallthru
      _
    // Predicated region
    $region18: #{tpu_custom_call.1} parent=1 // pred_check
      _
    $region19: #{tpu_custom_call.1} parent=1 // pred_check_branch
      %44 = sbr.rel (0) target = $region21
    $region20: #{tpu_custom_call.1} parent=1 // pred_region
      %46 = dma.done [#allocation6], 512
    $region21: #{tpu_custom_call.1} parent=1 // pred_fallthru
      _
    %v47 = vld [vmem:[#allocation2] sm:$0xff]
    %v48 = vld [vmem:[#allocation2 + $0x8] sm:$0xff]
    %v49 = vld [vmem:[#allocation5] sm:$0xff]
    %v50 = vld [vmem:[#allocation5 + $0x8] sm:$0xff]
    %v51 = vld [vmem:[#allocation5 + $0x10] sm:$0xff]
    %v52 = vld [vmem:[#allocation5 + $0x18] sm:$0xff]
    %v53 = vld [vmem:[%s2] sm:$0x1]
    %v55 = vperm.slane %v53, 0
    %vm57 = vcmask 261120
    %v59 = vsel %vm57, %v47, 0
    %v62 = vsel %vm57, %v48, 0
    %64 = vmatpush.msra.mxu0 0.0
    %65 = vmatpush.msra.mxu0 0.0
    %66 = vmatpush.msra.mxu0 0.0
    %67 = vmatpush.msra.mxu0 0.0
    %68 = vmatpush.msra.mxu0 0.0
    %69 = vmatpush.msra.mxu0 0.0
    %70 = vmatpush.msra.mxu0 0.0
    %71 = vmatpush.msra.mxu0 0.0
    %72 = vmatpush.msra.mxu0 0.0
    %73 = vmatpush.msra.mxu0 0.0
    %74 = vmatpush.msra.mxu0 0.0
    %75 = vmatpush.msra.mxu0 0.0
    %76 = vmatpush.msra.mxu0 %v52
    %77 = vmatpush.msra.mxu0 %v51
    %78 = vmatpush.msra.mxu0 %v50
    %79 = vmatpush.msra.mxu0 %v49
    %80 = vmatmul.f32.gmra.mxu0 %v59
    %v81 = vpop.f32.mrf.mxu0
    %v82 = vadd.f32 %v55, %v81
    %83 = vmatmul.f32.gmra.mxu0 %v62
    %v84 = vpop.f32.mrf.mxu0
    %v85 = vadd.f32 %v55, %v84
    %86 = vdwg.mxu0
    %vm87 = vcmask 785408
    %88 = vst.msk [vmem:[#allocation7] sm:$0xff] %vm87, %v82
    %89 = vst.msk [vmem:[#allocation7 + $0x8] sm:$0xff] %vm87, %v85
    // Predicated region
    $region22: #{tpu_custom_call.1} parent=1 // pred_check
      _
    $region23: #{tpu_custom_call.1} parent=1 // pred_check_branch
      %91 = sbr.rel (0) target = $region25
    $region24: #{tpu_custom_call.1} parent=1 // pred_region
      %93 = vsyncadd [#allocation4], 0
      %s94 = sshll.u32 [#allocation7], 4
      %s95 = int_to_ptr.vmem [resolvable:$true] %s94
      %s96 = sshll.u32 %s3, 4
      %s97 = int_to_ptr.hbm [resolvable:$true] %s96
      %102 = dma.vmem_to_hbm [thread:$0]  %s95, 256, %s97, [#allocation4], 128, 128, 8
    $region25: #{tpu_custom_call.1} parent=1 // pred_fallthru
      _
    // Predicated region
    $region26: #{tpu_custom_call.1} parent=1 // pred_check
      _
    $region27: #{tpu_custom_call.1} parent=1 // pred_check_branch
      %104 = sbr.rel (0) target = $region29
    $region28: #{tpu_custom_call.1} parent=1 // pred_region
      %106 = dma.done [#allocation4], 256
    $region29: #{tpu_custom_call.1} parent=1 // pred_fallthru
      _
    %107 = vsyncpa [#allocation3], 1
    %108 = vsyncpa [#allocation6], 1
    %109 = vsyncpa [#allocation4], 1

</llo_original>
